<compile_context>
chip_gen: v7x
topology: tpu7x:2x2x1
jax: 0.10.0
libtpu: 0.0.40
codegen_flags: <defaults>
</compile_context>

<pallas_src>
import functools
from typing import NamedTuple, Optional

import jax
import jax.numpy as jnp
from jax.experimental import pallas as pl
from jax.experimental.pallas import tpu as pltpu


def _round_up(v: int, m: int) -> int:
    return ((v + m - 1) // m) * m


def _default_vmem_limit_bytes() -> int:
    # v7x: 64 MiB physical VMEM per TensorCore -> leave headroom; v5e/v6e: 128 MiB physical.
    try:
        kind = jax.devices()[0].device_kind.lower()
    except Exception:
        kind = ""
    if "v7" in kind:
        return 48 * 1024 * 1024
    return 96 * 1024 * 1024


class MLPParams(NamedTuple):
    w1: jax.Array   # (D_in_p, H_p)    matmul dtype (bf16 by default)
    b1: jax.Array   # (1, H_p)         f32
    w2: jax.Array   # (H_p, D_out_p)   matmul dtype
    b2: jax.Array   # (1, D_out_p)     f32
    d_in: int
    d_hidden: int
    d_out: int


def prepare_params(w1, b1, w2, b2, *, matmul_dtype=jnp.bfloat16, feat_align=128) -> MLPParams:
    """Pad feature dims to `feat_align` and cast weights ONCE (hoisted out of the hot path).

    w1: (D_in, H), b1: (H,) or (1, H), w2: (H, D_out), b2: (D_out,) or (1, D_out).
    Weight layout is transposed w.r.t. torch nn.Linear storage, so the kernel computes
    y = relu(dropout(x @ w1 + b1)) @ w2 + b2.  feat_align=128 is optimal on all generations;
    256 may be used on v6e/v7x when H or D_out % 256 == 128.
    """
    D_in, H = w1.shape
    H2, D_out = w2.shape
    assert H2 == H, "w2 must be (hidden, out)"
    b1 = jnp.asarray(b1).reshape(1, H)
    b2 = jnp.asarray(b2).reshape(1, D_out)

    D_in_p = _round_up(D_in, feat_align)
    H_p = _round_up(H, feat_align)
    D_out_p = _round_up(D_out, feat_align)

    # Zero padding contributes nothing to the matmuls.
    w1_p = jnp.zeros((D_in_p, H_p), matmul_dtype).at[:D_in, :H].set(w1.astype(matmul_dtype))
    b1_p = jnp.zeros((1, H_p), jnp.float32).at[:, :H].set(b1.astype(jnp.float32))
    w2_p = jnp.zeros((H_p, D_out_p), matmul_dtype).at[:H, :D_out].set(w2.astype(matmul_dtype))
    b2_p = jnp.zeros((1, D_out_p), jnp.float32).at[:, :D_out].set(b2.astype(jnp.float32))
    return MLPParams(w1_p, b1_p, w2_p, b2_p, D_in, H, D_out)


def _mlp_kernel(x_ref, w1_ref, b1_ref, w2_ref, b2_ref, o_ref, *, drop_all):
    # fc1: x @ w1 on the MXU with f32 accumulation; bias add in f32 on the VPU.
    h = jnp.dot(x_ref[...], w1_ref[...], preferred_element_type=jnp.float32)
    h = h + b1_ref[...]                       # b1 is (1, H_p) -> broadcast over rows
    if drop_all:                              # p >= 1: dropout zeroes everything; relu(0) == 0
        h = jnp.zeros_like(h)
    else:                                     # p == 0: dropout is the identity
        h = jnp.maximum(h, 0.0)
    y = jnp.dot(h.astype(w2_ref.dtype), w2_ref[...], preferred_element_type=jnp.float32)
    o_ref[...] = (y + b2_ref[...]).astype(o_ref.dtype)   # lane-dense store (D_out padded to 128)


def _mlp_dropout_kernel(x_ref, bits_ref, w1_ref, b1_ref, w2_ref, b2_ref, o_ref,
                        *, drop_threshold, scale):
    h = jnp.dot(x_ref[...], w1_ref[...], preferred_element_type=jnp.float32)
    h = h + b1_ref[...]
    # Integer-threshold dropout: keep with prob 1 - p (bias <= 2^-32), no int->float convert.
    keep = bits_ref[...] >= jnp.uint32(drop_threshold)
    # relu fused into the dropout select: scale > 0 => relu(dropout(h)) == where(keep & h>0, ...)
    h = jnp.where(keep & (h > 0.0), h * scale, 0.0)
    y = jnp.dot(h.astype(w2_ref.dtype), w2_ref[...], preferred_element_type=jnp.float32)
    o_ref[...] = (y + b2_ref[...]).astype(o_ref.dtype)


def nn_with_dropout(x, params: MLPParams, *, p=0.0, key: Optional[jax.Array] = None,
                    tile_b: int = 256, vmem_limit_bytes: Optional[int] = None,
                    out_dtype=None):
    """Forward of NNWithDropout: relu(dropout(x @ w1 + b1, p)) @ w2 + b2.

    x: (B, D_in).  params: from prepare_params() (pad/cast once, reuse per call).
    0 < p < 1 requires a jax PRNG `key` (vary it per step for fresh dropout masks).
    """
    B, D_in = x.shape
    assert D_in == params.d_in, "x feature dim does not match params"
    D_in_p, H_p = params.w1.shape
    D_out_p = params.w2.shape[1]
    mat_dtype = params.w1.dtype
    out_dtype = x.dtype if out_dtype is None else out_dtype
    p = float(p)

    # Batch tiling: multiple of 16 (bf16 sublane packing; also a multiple of 8 for f32),
    # no 128-row cap — jnp.dot splits M internally and bigger tiles amortize per-step overhead.
    B_p = _round_up(B, 16)
    tile_b = min(max(16, _round_up(min(int(tile_b), B), 16)), B_p)
    grid = (pl.cdiv(B_p, tile_b),)

    # Only pad/cast x's feature dim (+ batch to a multiple of 16); the ragged last batch block
    # (when tile_b does not divide B_p) is handled by Pallas and sliced off below.
    x_p = jnp.zeros((B_p, D_in_p), mat_dtype).at[:B, :D_in].set(x.astype(mat_dtype))

    if vmem_limit_bytes is None:
        vmem_limit_bytes = _default_vmem_limit_bytes()

    # TODO(synk): for hidden dims whose (double-buffered) weights exceed the VMEM budget
    # (notably v7x's 64 MiB/TC), add a K/N-tiled fallback (grid axis over H with an f32 VMEM
    # accumulator marked "arbitrary") and single-buffer the constant weight blocks
    # (pipeline_mode=pl.Buffered(1)); omitted here to stay portable with interpret mode.

    x_spec = pl.BlockSpec((tile_b, D_in_p), lambda i: (i, 0))
    # Weights/biases: constant block index -> DMA'd once, VMEM-resident across the batch grid.
    w1_spec = pl.BlockSpec((D_in_p, H_p), lambda i: (0, 0))
    b1_spec = pl.BlockSpec((1, H_p), lambda i: (0, 0))
    w2_spec = pl.BlockSpec((H_p, D_out_p), lambda i: (0, 0))
    b2_spec = pl.BlockSpec((1, D_out_p), lambda i: (0, 0))
    out_spec = pl.BlockSpec((tile_b, D_out_p), lambda i: (i, 0))

    dropout_active = 0.0 < p < 1.0
    if dropout_active:
        if key is None:
            raise ValueError("dropout with 0 < p < 1 requires a PRNG `key`")
        # keep prob = 1 - p  <=>  keep when uint32 bits >= round(p * 2^32)
        drop_threshold = min(int(round(p * 4294967296.0)), 4294967295)
        bits = jax.random.bits(key, (B_p, H_p), dtype=jnp.uint32)
        kernel = functools.partial(_mlp_dropout_kernel,
                                   drop_threshold=drop_threshold, scale=1.0 / (1.0 - p))
        operands = (x_p, bits, params.w1, params.b1, params.w2, params.b2)
        in_specs = [x_spec, pl.BlockSpec((tile_b, H_p), lambda i: (i, 0)),
                    w1_spec, b1_spec, w2_spec, b2_spec]
    else:
        kernel = functools.partial(_mlp_kernel, drop_all=(p >= 1.0))
        operands = (x_p, params.w1, params.b1, params.w2, params.b2)
        in_specs = [x_spec, w1_spec, b1_spec, w2_spec, b2_spec]

    out_p = pl.pallas_call(
        kernel,
        out_shape=jax.ShapeDtypeStruct((B_p, D_out_p), out_dtype),
        grid=grid,
        in_specs=in_specs,
        out_specs=out_spec,
        compiler_params=pltpu.CompilerParams(
            # batch tiles are independent -> shard across TensorCores (2 TCs on v7x)
            dimension_semantics=("parallel",),
            vmem_limit_bytes=vmem_limit_bytes,
        ),
    )(*operands)

    return out_p[:B, :params.d_out]


if __name__ == "__main__":
    # Small shapes consistent with the module's forward (flat features -> fc1 -> dropout -> relu -> out).
    batch, input_dim, hidden_dim, output_dim = 8, 32, 64, 16

    key = jax.random.PRNGKey(0)
    kx, kw1, kb1, kw2, kb2, kdrop = jax.random.split(key, 6)

    # Deterministic init mimicking nn.Linear uniform(-1/sqrt(fan_in), 1/sqrt(fan_in)).
    bound1 = 1.0 / (input_dim ** 0.5)
    bound2 = 1.0 / (hidden_dim ** 0.5)
    w1 = jax.random.uniform(kw1, (input_dim, hidden_dim), jnp.float32, -bound1, bound1)
    b1 = jax.random.uniform(kb1, (hidden_dim,), jnp.float32, -bound1, bound1)
    w2 = jax.random.uniform(kw2, (hidden_dim, output_dim), jnp.float32, -bound2, bound2)
    b2 = jax.random.uniform(kb2, (output_dim,), jnp.float32, -bound2, bound2)
    x = jax.random.normal(kx, (batch, input_dim), jnp.float32)

    ref = jnp.maximum(x @ w1 + b1[None, :], 0.0) @ w2 + b2[None, :]

    # 1) f32 MXU path, p=0.0 (dropout = identity): must match the reference tightly.
    params_f32 = prepare_params(w1, b1, w2, b2, matmul_dtype=jnp.float32)
    out_f32 = jax.block_until_ready(nn_with_dropout(x, params_f32, p=0.0))
    assert out_f32.shape == (batch, output_dim)
    assert jnp.allclose(out_f32, ref, atol=1e-5, rtol=1e-5)

    # 2) bf16 MXU path (the default): f32 accumulation, bf16-level tolerance.
    params_bf16 = prepare_params(w1, b1, w2, b2)           # matmul_dtype defaults to bfloat16
    out_bf16 = jax.block_until_ready(nn_with_dropout(x, params_bf16, p=0.0))
    assert out_bf16.shape == (batch, output_dim)
    assert jnp.allclose(out_bf16, ref, atol=5e-2, rtol=5e-2)

    # 3) dropout active (p=0.5): exercises the integer-threshold mask + fused relu path.
    #    (Random mask -> no bitwise torch match expected; check shape + finiteness.)
    out_drop = jax.block_until_ready(nn_with_dropout(x, params_f32, p=0.5, key=kdrop))
    assert out_drop.shape == (batch, output_dim)
    assert bool(jnp.all(jnp.isfinite(out_drop)))

    # 4) p=1.0: everything dropped -> output is exactly the second-layer bias.
    out_p1 = jax.block_until_ready(nn_with_dropout(x, params_f32, p=1.0))
    assert jnp.allclose(out_p1, jnp.broadcast_to(b2[None, :], (batch, output_dim)), atol=1e-6)

    print("KERNEL_OK")
</pallas_src>

<mosaic_0001>
module attributes {stable_mosaic.version = 11 : i64} {
  func.func @_mlp_kernel(%arg0: i32, %arg1: memref<16x128xf32, #tpu.memory_space<vmem>>, %arg2: memref<128x128xf32, #tpu.memory_space<vmem>>, %arg3: memref<1x128xf32, #tpu.memory_space<vmem>>, %arg4: memref<128x128xf32, #tpu.memory_space<vmem>>, %arg5: memref<1x128xf32, #tpu.memory_space<vmem>>, %arg6: memref<16x128xf32, #tpu.memory_space<vmem>>) attributes {dimension_semantics = [#tpu.dimension_semantics<parallel>], iteration_bounds = array<i64: 1>, scalar_prefetch = 0 : i64, scratch_operands = 0 : i64, tpu.core_type = #tpu.core_type<tc>, window_params = [{transform_indices = @transform_0, window_bounds = array<i64: 16, 128>}, {pipeline_mode = #tpu.pipeline_mode<synchronous>, transform_indices = @transform_1, window_bounds = array<i64: 128, 128>}, {pipeline_mode = #tpu.pipeline_mode<synchronous>, transform_indices = @transform_2, window_bounds = array<i64: 1, 128>}, {pipeline_mode = #tpu.pipeline_mode<synchronous>, transform_indices = @transform_3, window_bounds = array<i64: 128, 128>}, {pipeline_mode = #tpu.pipeline_mode<synchronous>, transform_indices = @transform_4, window_bounds = array<i64: 1, 128>}, {transform_indices = @transform_5, window_bounds = array<i64: 16, 128>}]} {
    %c0 = arith.constant 0 : index
    %c0_0 = arith.constant 0 : index
    %0 = vector.load %arg1[%c0, %c0_0] : memref<16x128xf32, #tpu.memory_space<vmem>>, vector<16x128xf32>
    %c0_1 = arith.constant 0 : index
    %c0_2 = arith.constant 0 : index
    %1 = vector.load %arg2[%c0_1, %c0_2] : memref<128x128xf32, #tpu.memory_space<vmem>>, vector<128x128xf32>
    %cst = arith.constant dense<0.000000e+00> : vector<16x128xf32>
    %2 = tpu.matmul %0, %1, %cst {dimension_numbers = #tpu.dot_dimension_numbers<[1], [0], [0], [1], [0, 0, 1, 1], [], []>} : vector<16x128xf32>, vector<128x128xf32>, vector<16x128xf32> -> vector<16x128xf32>
    %c0_3 = arith.constant 0 : index
    %c0_4 = arith.constant 0 : index
    %3 = vector.load %arg3[%c0_3, %c0_4] : memref<1x128xf32, #tpu.memory_space<vmem>>, vector<1x128xf32>
    %4 = vector.broadcast %3 : vector<1x128xf32> to vector<16x128xf32>
    %5 = arith.addf %2, %4 : vector<16x128xf32>
    %cst_5 = arith.constant 0.000000e+00 : f32
    %6 = vector.broadcast %cst_5 : f32 to vector<16x128xf32>
    %7 = arith.maximumf %5, %6 : vector<16x128xf32>
    %c0_6 = arith.constant 0 : index
    %c0_7 = arith.constant 0 : index
    %8 = vector.load %arg4[%c0_6, %c0_7] : memref<128x128xf32, #tpu.memory_space<vmem>>, vector<128x128xf32>
    %cst_8 = arith.constant dense<0.000000e+00> : vector<16x128xf32>
    %9 = tpu.matmul %7, %8, %cst_8 {dimension_numbers = #tpu.dot_dimension_numbers<[1], [0], [0], [1], [0, 0, 1, 1], [], []>} : vector<16x128xf32>, vector<128x128xf32>, vector<16x128xf32> -> vector<16x128xf32>
    %c0_9 = arith.constant 0 : index
    %c0_10 = arith.constant 0 : index
    %10 = vector.load %arg5[%c0_9, %c0_10] : memref<1x128xf32, #tpu.memory_space<vmem>>, vector<1x128xf32>
    %11 = vector.broadcast %10 : vector<1x128xf32> to vector<16x128xf32>
    %12 = arith.addf %9, %11 : vector<16x128xf32>
    %c0_11 = arith.constant 0 : index
    %c0_12 = arith.constant 0 : index
    %13 = vector.load %arg6[%c0_11, %c0_12] : memref<16x128xf32, #tpu.memory_space<vmem>>, vector<16x128xf32>
    tpu.vector_store %arg6[%c0_11, %c0_12], %12 {strides = array<i32>} : memref<16x128xf32, #tpu.memory_space<vmem>>, vector<16x128xf32>,
    return
  }
  func.func @transform_0(%arg0: i32) -> (i32, i32) {
    %c0_i32 = arith.constant 0 : i32
    %c0_i32_0 = arith.constant 0 : i32
    return %arg0, %c0_i32 : i32, i32
  }
  func.func @transform_1(%arg0: i32) -> (i32, i32) {
    %c0_i32 = arith.constant 0 : i32
    %c0_i32_0 = arith.constant 0 : i32
    %c0_i32_1 = arith.constant 0 : i32
    return %c0_i32, %c0_i32_0 : i32, i32
  }
  func.func @transform_2(%arg0: i32) -> (i32, i32) {
    %c0_i32 = arith.constant 0 : i32
    %c0_i32_0 = arith.constant 0 : i32
    %c0_i32_1 = arith.constant 0 : i32
    return %c0_i32, %c0_i32_0 : i32, i32
  }
  func.func @transform_3(%arg0: i32) -> (i32, i32) {
    %c0_i32 = arith.constant 0 : i32
    %c0_i32_0 = arith.constant 0 : i32
    %c0_i32_1 = arith.constant 0 : i32
    return %c0_i32, %c0_i32_0 : i32, i32
  }
  func.func @transform_4(%arg0: i32) -> (i32, i32) {
    %c0_i32 = arith.constant 0 : i32
    %c0_i32_0 = arith.constant 0 : i32
    %c0_i32_1 = arith.constant 0 : i32
    return %c0_i32, %c0_i32_0 : i32, i32
  }
  func.func @transform_5(%arg0: i32) -> (i32, i32) {
    %c0_i32 = arith.constant 0 : i32
    %c0_i32_0 = arith.constant 0 : i32
    return %arg0, %c0_i32 : i32, i32
  }
}

</mosaic_0001>

<llo_original>
// kernel: tpu_custom_call.1
$region0: #{tpu_custom_call.1}
  #allocation0 [shape = 'u32[]', space=smem, size = 0x4, offset = 0x4, fixed_abs, tag = 'smem constant byte address 0x4 - core index']
  #allocation1 [shape = 'u32[144,128]{1,0:T(1,128)}', space=vmem, size = 0x12000, scoped, tag = 'internal scratch']
  %s0 = inlined_call_operand.hbm [shape: f32[16,128], index: 0, kind: input, shape index: {}]
  %s1 = inlined_call_operand.hbm [shape: f32[128,128], index: 1, kind: input, shape index: {}]
  %s2 = inlined_call_operand.hbm [shape: f32[1,128], index: 2, kind: input, shape index: {}]
  %s3 = inlined_call_operand.hbm [shape: f32[128,128], index: 3, kind: input, shape index: {}]
  %s4 = inlined_call_operand.hbm [shape: f32[1,128], index: 4, kind: input, shape index: {}]
  %s5 = inlined_call_operand.hbm [shape: f32[16,128], index: 5, kind: output, shape index: {}]
  %s6 = sld [smem:[#allocation0]]
  $region50: #{tpu_custom_call.1} parent=0
    _
  %s8 = ssub.s32 1, %s6
  %s9 = scalar_select 0, %s8, %s6
  $region1: #{tpu_custom_call.1} parent=0
    #allocation2 [shape = 'u8[8192]{0}', space=vmem, size = 0x2000, scoped, tag = 'input window, operand 0, single buffered']
    #allocation3 [shape = 's32[1]{0}', space=sflag, size = 0x4, scoped, tag = 'scoped memory for tpu_custom_call.1']
    #allocation4 [shape = 's32[1]{0}', space=sflag, size = 0x4, scoped, tag = 'scoped memory for tpu_custom_call.1']
    #allocation5 [shape = 'u8[65536]{0}', space=vmem, size = 0x10000, scoped, tag = 'input window, operand 1, single buffered']
    #allocation6 [shape = 's32[1]{0}', space=sflag, size = 0x4, scoped, tag = 'scoped memory for tpu_custom_call.1']
    #allocation7 [shape = 'u8[512]{0}', space=vmem, size = 0x400, scoped, tag = 'input window, operand 2, single buffered']
    #allocation8 [shape = 'u8[65536]{0}', space=vmem, size = 0x10000, scoped, tag = 'input window, operand 3, single buffered']
    #allocation9 [shape = 's32[1]{0}', space=sflag, size = 0x4, scoped, tag = 'scoped memory for tpu_custom_call.1']
    #allocation10 [shape = 'u8[512]{0}', space=vmem, size = 0x400, scoped, tag = 'input window, operand 4, single buffered']
    #allocation11 [shape = 'u8[8192]{0}', space=vmem, size = 0x2000, scoped, tag = 'output window, operand 0, single buffered']
    %10 = vsyncpa [#allocation3], 0
    %11 = vsyncpa [#allocation6], 0
    %12 = vsyncpa [#allocation9], 0
    %13 = vsyncpa [#allocation4], 0
    // Predicated region
    $region2: #{tpu_custom_call.1} parent=1 // pred_check
      _
    $region3: #{tpu_custom_call.1} parent=1 // pred_check_branch
      %15 = sbr.rel (0) target = $region5
    $region4: #{tpu_custom_call.1} parent=1 // pred_region
      %s17 = ssub.s32 256, 256
      %18 = vsyncadd [#allocation3], %s17
      %s19 = sshll.u32 [#allocation2], 4
      %s20 = int_to_ptr.vmem [resolvable:$true] %s19
      %25 = dma.hbm_to_vmem [thread:$0]  %s0, 256, %s20, [#allocation3], 128, 128, 8
    $region5: #{tpu_custom_call.1} parent=1 // pred_fallthru
      _
    // Predicated region
    $region6: #{tpu_custom_call.1} parent=1 // pred_check
      _
    $region7: #{tpu_custom_call.1} parent=1 // pred_check_branch
      %27 = sbr.rel (0) target = $region9
    $region8: #{tpu_custom_call.1} parent=1 // pred_region
      %s29 = ssub.s32 2048, 2048
      %30 = vsyncadd [#allocation6], %s29
      %s31 = sshll.u32 [#allocation5], 4
      %s32 = int_to_ptr.vmem [resolvable:$true] %s31
      %37 = dma.hbm_to_vmem [thread:$0]  %s1, 2048, %s32, [#allocation6], 128, 128, 8
    $region9: #{tpu_custom_call.1} parent=1 // pred_fallthru
      _
    // Predicated region
    $region10: #{tpu_custom_call.1} parent=1 // pred_check
      _
    $region11: #{tpu_custom_call.1} parent=1 // pred_check_branch
      %39 = sbr.rel (0) target = $region13
    $region12: #{tpu_custom_call.1} parent=1 // pred_region
      %s41 = ssub.s32 16, 16
      %42 = vsyncadd [#allocation6], %s41
      %s44 = sshll.u32 [#allocation7], 4
      %s45 = int_to_ptr.vmem [resolvable:$true] %s44
      %47 = dma.hbm_to_vmem [thread:$0]  %s2, 16, %s45, [#allocation6]
    $region13: #{tpu_custom_call.1} parent=1 // pred_fallthru
      _
    // Predicated region
    $region14: #{tpu_custom_call.1} parent=1 // pred_check
      _
    $region15: #{tpu_custom_call.1} parent=1 // pred_check_branch
      %49 = sbr.rel (0) target = $region17
    $region16: #{tpu_custom_call.1} parent=1 // pred_region
      %s51 = ssub.s32 2048, 2048
      %52 = vsyncadd [#allocation9], %s51
      %s53 = sshll.u32 [#allocation8], 4
      %s54 = int_to_ptr.vmem [resolvable:$true] %s53
      %59 = dma.hbm_to_vmem [thread:$0]  %s3, 2048, %s54, [#allocation9], 128, 128, 8
    $region17: #{tpu_custom_call.1} parent=1 // pred_fallthru
      _
    // Predicated region
    $region18: #{tpu_custom_call.1} parent=1 // pred_check
      _
    $region19: #{tpu_custom_call.1} parent=1 // pred_check_branch
      %61 = sbr.rel (0) target = $region21
    $region20: #{tpu_custom_call.1} parent=1 // pred_region
      %s63 = ssub.s32 16, 16
      %64 = vsyncadd [#allocation9], %s63
      %s66 = sshll.u32 [#allocation10], 4
      %s67 = int_to_ptr.vmem [resolvable:$true] %s66
      %69 = dma.hbm_to_vmem [thread:$0]  %s4, 16, %s67, [#allocation9]
    $region21: #{tpu_custom_call.1} parent=1 // pred_fallthru
      _
    // Predicated region
    $region22: #{tpu_custom_call.1} parent=1 // pred_check
      _
    $region23: #{tpu_custom_call.1} parent=1 // pred_check_branch
      %71 = sbr.rel (0) target = $region25
    $region24: #{tpu_custom_call.1} parent=1 // pred_region
      %72 = dma.done [#allocation3], 256
    $region25: #{tpu_custom_call.1} parent=1 // pred_fallthru
      _
    // Predicated region
    $region26: #{tpu_custom_call.1} parent=1 // pred_check
      _
    $region27: #{tpu_custom_call.1} parent=1 // pred_check_branch
      %74 = sbr.rel (0) target = $region29
    $region28: #{tpu_custom_call.1} parent=1 // pred_region
      %75 = dma.done [#allocation6], 2048
    $region29: #{tpu_custom_call.1} parent=1 // pred_fallthru
      _
    // Predicated region
    $region30: #{tpu_custom_call.1} parent=1 // pred_check
      _
    $region31: #{tpu_custom_call.1} parent=1 // pred_check_branch
      %77 = sbr.rel (0) target = $region33
    $region32: #{tpu_custom_call.1} parent=1 // pred_region
      %78 = dma.done [#allocation6], 16
    $region33: #{tpu_custom_call.1} parent=1 // pred_fallthru
      _
    // Predicated region
    $region34: #{tpu_custom_call.1} parent=1 // pred_check
      _
    $region35: #{tpu_custom_call.1} parent=1 // pred_check_branch
      %80 = sbr.rel (0) target = $region37
    $region36: #{tpu_custom_call.1} parent=1 // pred_region
      %81 = dma.done [#allocation9], 2048
    $region37: #{tpu_custom_call.1} parent=1 // pred_fallthru
      _
    // Predicated region
    $region38: #{tpu_custom_call.1} parent=1 // pred_check
      _
    $region39: #{tpu_custom_call.1} parent=1 // pred_check_branch
      %83 = sbr.rel (0) target = $region41
    $region40: #{tpu_custom_call.1} parent=1 // pred_region
      %84 = dma.done [#allocation9], 16
    $region41: #{tpu_custom_call.1} parent=1 // pred_fallthru
      _
    %v85 = vld [vmem:[#allocation2] sm:$0xff]
    %v86 = vld [vmem:[#allocation2 + $0x8] sm:$0xff]
    %v87 = vld [vmem:[#allocation5] sm:$0xff]
    %v88 = vld [vmem:[#allocation5 + $0x8] sm:$0xff]
    %v89 = vld [vmem:[#allocation5 + $0x10] sm:$0xff]
    %v90 = vld [vmem:[#allocation5 + $0x18] sm:$0xff]
    %v91 = vld [vmem:[#allocation5 + $0x20] sm:$0xff]
    %v92 = vld [vmem:[#allocation5 + $0x28] sm:$0xff]
    %v93 = vld [vmem:[#allocation5 + $0x30] sm:$0xff]
    %v94 = vld [vmem:[#allocation5 + $0x38] sm:$0xff]
    %v95 = vld [vmem:[#allocation5 + $0x40] sm:$0xff]
    %v96 = vld [vmem:[#allocation5 + $0x48] sm:$0xff]
    %v97 = vld [vmem:[#allocation5 + $0x50] sm:$0xff]
    %v98 = vld [vmem:[#allocation5 + $0x58] sm:$0xff]
    %v99 = vld [vmem:[#allocation5 + $0x60] sm:$0xff]
    %v100 = vld [vmem:[#allocation5 + $0x68] sm:$0xff]
    %v101 = vld [vmem:[#allocation5 + $0x70] sm:$0xff]
    %v102 = vld [vmem:[#allocation5 + $0x78] sm:$0xff]
    %v103 = vld [vmem:[#allocation7] sm:$0x1]
    %v105 = vlaneseq
    %v106 = vshrl.u32 %v105, 7
    %v107 = vsub.s32 0, %v106
    %v108 = vrot.slane %v103, %v107
    %110 = vmatprep.subr.mxu0 0.0
    %111 = vmatpush1.msra.mxu0 %v87
    %112 = vmatprep.subr.mxu0 0.0
    %113 = vmatpush1.msra.mxu0 %v88
    %114 = vmatprep.subr.mxu0 0.0
    %115 = vmatpush1.msra.mxu0 %v89
    %116 = vmatprep.subr.mxu0 0.0
    %117 = vmatpush1.msra.mxu0 %v90
    %118 = vmatprep.subr.mxu0 0.0
    %119 = vmatpush1.msra.mxu0 %v91
    %120 = vmatprep.subr.mxu0 0.0
    %121 = vmatpush1.msra.mxu0 %v92
    %122 = vmatprep.subr.mxu0 0.0
    %123 = vmatpush1.msra.mxu0 %v93
    %124 = vmatprep.subr.mxu0 0.0
    %125 = vmatpush1.msra.mxu0 %v94
    %126 = vmatprep.subr.mxu0 0.0
    %127 = vmatpush1.msra.mxu0 %v95
    %128 = vmatprep.subr.mxu0 0.0
    %129 = vmatpush1.msra.mxu0 %v96
    %130 = vmatprep.subr.mxu0 0.0
    %131 = vmatpush1.msra.mxu0 %v97
    %132 = vmatprep.subr.mxu0 0.0
    %133 = vmatpush1.msra.mxu0 %v98
    %134 = vmatprep.subr.mxu0 0.0
    %135 = vmatpush1.msra.mxu0 %v99
    %136 = vmatprep.subr.mxu0 0.0
    %137 = vmatpush1.msra.mxu0 %v100
    %138 = vmatprep.subr.mxu0 0.0
    %139 = vmatpush1.msra.mxu0 %v101
    %140 = vmatprep.subr.mxu0 0.0
    %141 = vmatpush1.msra.mxu0 %v102
    %142 = vmatprep.subr.mxu0 0.0
    %143 = vmatpush1.msra.mxu0 0.0
    %144 = vmatprep.subr.mxu0 0.0
    %145 = vmatpush1.msra.mxu0 0.0
    %146 = vmatprep.subr.mxu0 0.0
    %147 = vmatpush1.msra.mxu0 0.0
    %148 = vmatprep.subr.mxu0 0.0
    %149 = vmatpush1.msra.mxu0 0.0
    %150 = vmatprep.subr.mxu0 0.0
    %151 = vmatpush1.msra.mxu0 0.0
    %152 = vmatprep.subr.mxu0 0.0
    %153 = vmatpush1.msra.mxu0 0.0
    %154 = vmatprep.subr.mxu0 0.0
    %155 = vmatpush1.msra.mxu0 0.0
    %156 = vmatprep.subr.mxu0 0.0
    %157 = vmatpush1.msra.mxu0 0.0
    %158 = vmatprep.subr.mxu0 0.0
    %159 = vmatpush1.msra.mxu0 0.0
    %160 = vmatprep.subr.mxu0 0.0
    %161 = vmatpush1.msra.mxu0 0.0
    %162 = vmatprep.subr.mxu0 0.0
    %163 = vmatpush1.msra.mxu0 0.0
    %164 = vmatprep.subr.mxu0 0.0
    %165 = vmatpush1.msra.mxu0 0.0
    %166 = vmatprep.subr.mxu0 0.0
    %167 = vmatpush1.msra.mxu0 0.0
    %168 = vmatprep.subr.mxu0 0.0
    %169 = vmatpush1.msra.mxu0 0.0
    %170 = vmatprep.subr.mxu0 0.0
    %171 = vmatpush1.msra.mxu0 0.0
    %172 = vmatprep.subr.mxu0 0.0
    %173 = vmatpush1.msra.mxu0 0.0
    %174 = vmatprep.mubr.f32.mxu0 0.0
    %175 = vmatmul.mubr.f32.gmra.mrb[0].mxu0 %v85
    %v176 = vpop.f32.mrb[0].mxu0
    %v177 = vadd.f32 %v108, %v176
    %v178 = vpop.f32.mrb[0].mxu0
    %179 = vmatprep.mubr.f32.mxu0 0.0
    %180 = vmatmul.mubr.f32.gmra.mrb[0].mxu0 %v86
    %v181 = vpop.f32.mrb[0].mxu0
    %v182 = vadd.f32 %v108, %v181
    %v183 = vpop.f32.mrb[0].mxu0
    %184 = vdwg.mxu0
    %v185 = vmax.f32 %v177, 0.0
    %v186 = vmax.f32 %v182, 0.0
    %v187 = vld [vmem:[#allocation8] sm:$0xff]
    %v188 = vld [vmem:[#allocation8 + $0x8] sm:$0xff]
    %v189 = vld [vmem:[#allocation8 + $0x10] sm:$0xff]
    %v190 = vld [vmem:[#allocation8 + $0x18] sm:$0xff]
    %v191 = vld [vmem:[#allocation8 + $0x20] sm:$0xff]
    %v192 = vld [vmem:[#allocation8 + $0x28] sm:$0xff]
    %v193 = vld [vmem:[#allocation8 + $0x30] sm:$0xff]
    %v194 = vld [vmem:[#allocation8 + $0x38] sm:$0xff]
    %v195 = vld [vmem:[#allocation8 + $0x40] sm:$0xff]
    %v196 = vld [vmem:[#allocation8 + $0x48] sm:$0xff]
    %v197 = vld [vmem:[#allocation8 + $0x50] sm:$0xff]
    %v198 = vld [vmem:[#allocation8 + $0x58] sm:$0xff]
    %v199 = vld [vmem:[#allocation8 + $0x60] sm:$0xff]
    %v200 = vld [vmem:[#allocation8 + $0x68] sm:$0xff]
    %v201 = vld [vmem:[#allocation8 + $0x70] sm:$0xff]
    %v202 = vld [vmem:[#allocation8 + $0x78] sm:$0xff]
    %v203 = vld [vmem:[#allocation10] sm:$0x1]
    %v205 = vlaneseq
    %v206 = vshrl.u32 %v205, 7
    %v207 = vsub.s32 0, %v206
    %v208 = vrot.slane %v203, %v207
    %210 = vmatprep.subr.mxu0 0.0
    %211 = vmatpush1.msra.mxu0 %v187
    %212 = vmatprep.subr.mxu0 0.0
    %213 = vmatpush1.msra.mxu0 %v188
    %214 = vmatprep.subr.mxu0 0.0
    %215 = vmatpush1.msra.mxu0 %v189
    %216 = vmatprep.subr.mxu0 0.0
    %217 = vmatpush1.msra.mxu0 %v190
    %218 = vmatprep.subr.mxu0 0.0
    %219 = vmatpush1.msra.mxu0 %v191
    %220 = vmatprep.subr.mxu0 0.0
    %221 = vmatpush1.msra.mxu0 %v192
    %222 = vmatprep.subr.mxu0 0.0
    %223 = vmatpush1.msra.mxu0 %v193
    %224 = vmatprep.subr.mxu0 0.0
    %225 = vmatpush1.msra.mxu0 %v194
    %226 = vmatprep.subr.mxu0 0.0
    %227 = vmatpush1.msra.mxu0 %v195
    %228 = vmatprep.subr.mxu0 0.0
    %229 = vmatpush1.msra.mxu0 %v196
    %230 = vmatprep.subr.mxu0 0.0
    %231 = vmatpush1.msra.mxu0 %v197
    %232 = vmatprep.subr.mxu0 0.0
    %233 = vmatpush1.msra.mxu0 %v198
    %234 = vmatprep.subr.mxu0 0.0
    %235 = vmatpush1.msra.mxu0 %v199
    %236 = vmatprep.subr.mxu0 0.0
    %237 = vmatpush1.msra.mxu0 %v200
    %238 = vmatprep.subr.mxu0 0.0
    %239 = vmatpush1.msra.mxu0 %v201
    %240 = vmatprep.subr.mxu0 0.0
    %241 = vmatpush1.msra.mxu0 %v202
    %242 = vmatprep.subr.mxu0 0.0
    %243 = vmatpush1.msra.mxu0 0.0
    %244 = vmatprep.subr.mxu0 0.0
    %245 = vmatpush1.msra.mxu0 0.0
    %246 = vmatprep.subr.mxu0 0.0
    %247 = vmatpush1.msra.mxu0 0.0
    %248 = vmatprep.subr.mxu0 0.0
    %249 = vmatpush1.msra.mxu0 0.0
    %250 = vmatprep.subr.mxu0 0.0
    %251 = vmatpush1.msra.mxu0 0.0
    %252 = vmatprep.subr.mxu0 0.0
    %253 = vmatpush1.msra.mxu0 0.0
    %254 = vmatprep.subr.mxu0 0.0
    %255 = vmatpush1.msra.mxu0 0.0
    %256 = vmatprep.subr.mxu0 0.0
    %257 = vmatpush1.msra.mxu0 0.0
    %258 = vmatprep.subr.mxu0 0.0
    %259 = vmatpush1.msra.mxu0 0.0
    %260 = vmatprep.subr.mxu0 0.0
    %261 = vmatpush1.msra.mxu0 0.0
    %262 = vmatprep.subr.mxu0 0.0
    %263 = vmatpush1.msra.mxu0 0.0
    %264 = vmatprep.subr.mxu0 0.0
    %265 = vmatpush1.msra.mxu0 0.0
    %266 = vmatprep.subr.mxu0 0.0
    %267 = vmatpush1.msra.mxu0 0.0
    %268 = vmatprep.subr.mxu0 0.0
    %269 = vmatpush1.msra.mxu0 0.0
    %270 = vmatprep.subr.mxu0 0.0
    %271 = vmatpush1.msra.mxu0 0.0
    %272 = vmatprep.subr.mxu0 0.0
    %273 = vmatpush1.msra.mxu0 0.0
    %274 = vmatprep.mubr.f32.mxu0 0.0
    %275 = vmatmul.mubr.f32.gmra.mrb[0].mxu0 %v185
    %v276 = vpop.f32.mrb[0].mxu0
    %v277 = vadd.f32 %v208, %v276
    %v278 = vpop.f32.mrb[0].mxu0
    %279 = vmatprep.mubr.f32.mxu0 0.0
    %280 = vmatmul.mubr.f32.gmra.mrb[0].mxu0 %v186
    %v281 = vpop.f32.mrb[0].mxu0
    %v282 = vadd.f32 %v208, %v281
    %v283 = vpop.f32.mrb[0].mxu0
    %284 = vdwg.mxu0
    %285 = vst [vmem:[#allocation11] sm:$0xff] %v277
    %286 = vst [vmem:[#allocation11 + $0x8] sm:$0xff] %v282
    // Predicated region
    $region42: #{tpu_custom_call.1} parent=1 // pred_check
      _
    $region43: #{tpu_custom_call.1} parent=1 // pred_check_branch
      %288 = sbr.rel (0) target = $region45
    $region44: #{tpu_custom_call.1} parent=1 // pred_region
      %s290 = ssub.s32 256, 256
      %291 = vsyncadd [#allocation4], %s290
      %s292 = sshll.u32 [#allocation11], 4
      %s293 = int_to_ptr.vmem [resolvable:$true] %s292
      %298 = dma.vmem_to_hbm [thread:$0]  %s293, 256, %s5, [#allocation4], 128, 128, 8
    $region45: #{tpu_custom_call.1} parent=1 // pred_fallthru
      _
    // Predicated region
    $region46: #{tpu_custom_call.1} parent=1 // pred_check
      _
    $region47: #{tpu_custom_call.1} parent=1 // pred_check_branch
      %300 = sbr.rel (0) target = $region49
    $region48: #{tpu_custom_call.1} parent=1 // pred_region
      %301 = dma.done [#allocation4], 256
    $region49: #{tpu_custom_call.1} parent=1 // pred_fallthru
      _
    %302 = vsyncpa [#allocation3], 1
    %303 = vsyncpa [#allocation6], 1
    %304 = vsyncpa [#allocation9], 1
    %305 = vsyncpa [#allocation4], 1

</llo_original>
